<compile_context>
chip_gen: v7x
topology: tpu7x:2x2x1
jax: 0.10.0
libtpu: 0.0.40
codegen_flags: <defaults>
</compile_context>

<pallas_src>
import jax
import jax.numpy as jnp
from jax import lax
from jax.experimental import pallas as pl
from jax.experimental.pallas import tpu as pltpu


# ---------------------------------------------------------------------------
# Prologue: A = triu(W) + triu(W, 1).T  (only used when M is large)
# ---------------------------------------------------------------------------
def _symmetrize_kernel(w_ref, wt_ref, a_ref):
    """(i, j) tile of A.

    w_ref  : tile of W at block (i, j)   -> supplies W[r, c]
    wt_ref : tile of W at block (j, i)   -> wt_ref.T supplies W[c, r]
    """
    i = pl.program_id(0)
    j = pl.program_id(1)

    @pl.when(i < j)            # strictly above the diagonal: A = W
    def _():
        a_ref[...] = w_ref[...].astype(a_ref.dtype)

    @pl.when(i > j)            # strictly below the diagonal: A = W.T
    def _():
        a_ref[...] = wt_ref[...].T.astype(a_ref.dtype)

    @pl.when(i == j)           # diagonal tile: per-element select (local iota)
    def _():
        row = lax.broadcasted_iota(jnp.int32, w_ref.shape, 0)
        col = lax.broadcasted_iota(jnp.int32, w_ref.shape, 1)
        a_ref[...] = jnp.where(col >= row, w_ref[...], wt_ref[...].T).astype(a_ref.dtype)


def symmetrize(weight, *, out_dtype=None, tb=256):
    """A = triu(W) + triu(W, 1).T as a standalone prologue kernel."""
    N = weight.shape[0]
    assert weight.shape == (N, N)
    out_dtype = out_dtype or weight.dtype
    tb = _pick_tile(N, tb, 128)
    grid = (N // tb, N // tb)
    return pl.pallas_call(
        _symmetrize_kernel,
        out_shape=jax.ShapeDtypeStruct((N, N), out_dtype),
        grid=grid,
        in_specs=[
            pl.BlockSpec((tb, tb), lambda i, j: (i, j)),   # W block (i, j)
            pl.BlockSpec((tb, tb), lambda i, j: (j, i)),   # W block (j, i)
        ],
        out_specs=pl.BlockSpec((tb, tb), lambda i, j: (i, j)),
        compiler_params=pltpu.CompilerParams(
            dimension_semantics=("parallel", "parallel")
        ),
    )(weight, weight)


# ---------------------------------------------------------------------------
# Matmul kernels on a pre-symmetrized A (prologue path)
# ---------------------------------------------------------------------------
def _matmul_kernel(x_ref, a_ref, o_ref, acc_ref):
    """o = x @ A with an f32 VMEM accumulator resident across the K axis."""
    @pl.when(pl.program_id(2) == 0)
    def _():
        acc_ref[...] = jnp.zeros_like(acc_ref)

    acc_ref[...] += jnp.dot(x_ref[...], a_ref[...],
                            preferred_element_type=jnp.float32)

    @pl.when(pl.program_id(2) == pl.num_programs(2) - 1)
    def _():
        o_ref[...] = acc_ref[...].astype(o_ref.dtype)


def _matmul_kernel_k1(x_ref, a_ref, o_ref):
    """K grid collapsed to 1: write directly, no accumulator round-trip."""
    o_ref[...] = jnp.dot(x_ref[...], a_ref[...],
                         preferred_element_type=jnp.float32).astype(o_ref.dtype)


# ---------------------------------------------------------------------------
# Fused kernels: build the A tile from W in-kernel (small-M path)
# ---------------------------------------------------------------------------
def _fused_kernel(x_ref, wkj_ref, wjk_ref, o_ref, acc_ref):
    """A tile at (rows k*tk.., cols j*tn..) built from W blocks (k,j)/(j,k)."""
    j = pl.program_id(1)
    k = pl.program_id(2)
    tk, tn = wkj_ref.shape

    @pl.when(k == 0)
    def _():
        acc_ref[...] = jnp.zeros_like(acc_ref)

    row = k * tk + lax.broadcasted_iota(jnp.int32, (tk, tn), 0)
    col = j * tn + lax.broadcasted_iota(jnp.int32, (tk, tn), 1)
    # Select (VPU) + transpose (XLU) ride free slots while MXU/DMA dominate.
    a_tile = jnp.where(col >= row, wkj_ref[...], wjk_ref[...].T)

    acc_ref[...] += jnp.dot(x_ref[...], a_tile.astype(x_ref.dtype),
                            preferred_element_type=jnp.float32)

    @pl.when(k == pl.num_programs(2) - 1)
    def _():
        o_ref[...] = acc_ref[...].astype(o_ref.dtype)


def _fused_kernel_k1(x_ref, wkj_ref, wjk_ref, o_ref):
    """Fused symmetrize + matmul, K grid == 1 (module-sized shapes)."""
    j = pl.program_id(1)
    tk, tn = wkj_ref.shape
    row = lax.broadcasted_iota(jnp.int32, (tk, tn), 0)            # k == 0
    col = j * tn + lax.broadcasted_iota(jnp.int32, (tk, tn), 1)
    a_tile = jnp.where(col >= row, wkj_ref[...], wjk_ref[...].T)
    o_ref[...] = jnp.dot(x_ref[...], a_tile.astype(x_ref.dtype),
                         preferred_element_type=jnp.float32).astype(o_ref.dtype)


# ---------------------------------------------------------------------------
# Tiling helpers
# ---------------------------------------------------------------------------
def _pick_tile(dim, preferred, quantum):
    """Largest multiple of `quantum` that divides `dim` and is <= `preferred`.

    Falls back to the full extent only for small dims (or no aligned divisor),
    which is legal per the (8, 128) BlockSpec rule.
    """
    if dim <= preferred:
        return dim
    t = (preferred // quantum) * quantum
    while t >= quantum:
        if dim % t == 0:
            return t
        t -= quantum
    return dim


# ---------------------------------------------------------------------------
# Public wrapper
# ---------------------------------------------------------------------------
def linear_symmetric(x, weight, *, mxu_dtype=None, tm=256, tn=256, tk=512,
                     prologue_min_m_tiles=8, tb=256):
    """x: (M, N), weight: (N, N) -> (M, N) = x @ (triu(W) + triu(W,1).T).

    mxu_dtype=jnp.bfloat16 casts x and W once (wrapper-side), halving HBM /
    VMEM traffic and unlocking the native bf16 MXU rate (f32 accumulate kept).
    Default None keeps exact f32 semantics matching the PyTorch module.
    """
    out_dtype = x.dtype
    M, N = x.shape
    assert weight.shape == (N, N)

    if mxu_dtype is not None:
        x = x.astype(mxu_dtype)
        weight = weight.astype(mxu_dtype)
    isz = jnp.dtype(x.dtype).itemsize

    tm = _pick_tile(M, tm, 8)
    tn = _pick_tile(N, tn, 128)    # 256-multiples preferred for v6e/v7x MXU
    tk = _pick_tile(N, tk, 128)
    grid_m, grid_n, grid_k = M // tm, N // tn, N // tk
    grid = (grid_m, grid_n, grid_k)

    cost = pl.CostEstimate(
        flops=2 * M * N * N,
        transcendentals=0,
        bytes_accessed=(M * N + 2 * N * N + M * N) * isz,
    )

    use_prologue = grid_m >= prologue_min_m_tiles
    need_acc = grid_k > 1

    if use_prologue:
        # Large M: hoist the O(N^2) symmetrization, amortized over M/tm reuses.
        a = symmetrize(weight, tb=tb)
        operands = (x, a)
        in_specs = [
            pl.BlockSpec((tm, tk), lambda i, j, k: (i, k)),
            pl.BlockSpec((tk, tn), lambda i, j, k: (k, j)),
        ]
        kernel = _matmul_kernel if need_acc else _matmul_kernel_k1
        ws = 2 * (tm * tk + tk * tn + tm * tn) * isz
    else:
        # Small M: fuse symmetrization into the matmul (one launch, no A array).
        operands = (x, weight, weight)
        in_specs = [
            pl.BlockSpec((tm, tk), lambda i, j, k: (i, k)),
            pl.BlockSpec((tk, tn), lambda i, j, k: (k, j)),   # W block (k, j)
            pl.BlockSpec((tn, tk), lambda i, j, k: (j, k)),   # W block (j, k)
        ]
        kernel = _fused_kernel if need_acc else _fused_kernel_k1
        ws = 2 * (tm * tk + tk * tn + tn * tk + tm * tn) * isz

    scratch = [pltpu.VMEM((tm, tn), jnp.float32)] if need_acc else []
    if need_acc:
        ws += tm * tn * 4
    # Explicit scoped-VMEM limit: headroom over the double-buffered working
    # set, capped at 64 MiB so the same config also fits v7x physical VMEM.
    vmem_limit = int(min(max(2 * ws, 16 * 2**20), 64 * 2**20))

    return pl.pallas_call(
        kernel,
        out_shape=jax.ShapeDtypeStruct((M, N), out_dtype),
        grid=grid,
        in_specs=in_specs,
        out_specs=pl.BlockSpec((tm, tn), lambda i, j, k: (i, j)),
        scratch_shapes=scratch,
        compiler_params=pltpu.CompilerParams(
            dimension_semantics=("parallel", "parallel", "arbitrary"),
            vmem_limit_bytes=vmem_limit,
        ),
        cost_estimate=cost,
    )(*operands)


if __name__ == "__main__":
    key = jax.random.PRNGKey(0)
    kx, kw, kx2, kw2, kx3, kw3 = jax.random.split(key, 6)

    def ref_fn(x, w):
        a = jnp.triu(w) + jnp.triu(w, 1).T
        return x @ a

    # --- Case 1: module-sized shapes (batch=8, n_features=32), fused f32 path.
    batch, n_features = 8, 32
    x1 = jax.random.uniform(kx, (batch, n_features), dtype=jnp.float32)
    w1 = jax.random.uniform(kw, (n_features, n_features), dtype=jnp.float32)
    out1 = linear_symmetric(x1, w1)
    jax.block_until_ready(out1)
    assert jnp.allclose(out1, ref_fn(x1, w1), atol=1e-5, rtol=1e-5), "mismatch (8x32)"

    # --- Case 2: lane-dense shapes, fused path, single-K fast path. ---
    M2, N2 = 16, 256
    x2 = jax.random.uniform(kx2, (M2, N2), dtype=jnp.float32)
    w2 = jax.random.uniform(kw2, (N2, N2), dtype=jnp.float32)
    out2 = linear_symmetric(x2, w2)
    jax.block_until_ready(out2)
    assert jnp.allclose(out2, ref_fn(x2, w2), atol=1e-3, rtol=1e-3), "mismatch (16x256)"

    # --- Case 3: large-M -> prologue symmetrize + multi-K accumulator path. ---
    M3, N3 = 1024, 512
    x3 = jax.random.uniform(kx3, (M3, N3), dtype=jnp.float32)
    w3 = jax.random.uniform(kw3, (N3, N3), dtype=jnp.float32)
    out3 = linear_symmetric(x3, w3, tm=128, tn=256, tk=128)   # grid (8, 2, 4)
    jax.block_until_ready(out3)
    assert jnp.allclose(out3, ref_fn(x3, w3), atol=1e-2, rtol=1e-3), "mismatch (1024x512)"

    # TODO(synk): the module's `print(a)` debug statement is intentionally omitted.
    print("KERNEL_OK")
</pallas_src>

<mosaic_0001>
module attributes {stable_mosaic.version = 11 : i64} {
  func.func @_fused_kernel_k1(%arg0: i32, %arg1: i32, %arg2: i32, %arg3: memref<8x32xf32, #tpu.memory_space<vmem>>, %arg4: memref<32x32xf32, #tpu.memory_space<vmem>>, %arg5: memref<32x32xf32, #tpu.memory_space<vmem>>, %arg6: memref<8x32xf32, #tpu.memory_space<vmem>>) attributes {dimension_semantics = [#tpu.dimension_semantics<parallel>, #tpu.dimension_semantics<parallel>, #tpu.dimension_semantics<arbitrary>], iteration_bounds = array<i64: 1, 1, 1>, scalar_prefetch = 0 : i64, scratch_operands = 0 : i64, tpu.core_type = #tpu.core_type<tc>, window_params = [{transform_indices = @transform_0, window_bounds = array<i64: 8, 32>}, {transform_indices = @transform_1, window_bounds = array<i64: 32, 32>}, {transform_indices = @transform_2, window_bounds = array<i64: 32, 32>}, {transform_indices = @transform_3, window_bounds = array<i64: 8, 32>}]} {
    %0 = tpu.iota {dimensions = array<i32: 0>} : vector<32x32xi32>
    %c32_i32 = arith.constant 32 : i32
    %1 = arith.muli %arg1, %c32_i32 : i32
    %2 = tpu.iota {dimensions = array<i32: 1>} : vector<32x32xi32>
    %3 = vector.broadcast %1 : i32 to vector<32x32xi32>
    %4 = arith.addi %3, %2 : vector<32x32xi32>
    %5 = arith.cmpi sge, %4, %0 : vector<32x32xi32>
    %c0 = arith.constant 0 : index
    %c0_0 = arith.constant 0 : index
    %6 = vector.load %arg4[%c0, %c0_0] : memref<32x32xf32, #tpu.memory_space<vmem>>, vector<32x32xf32>
    %c0_1 = arith.constant 0 : index
    %c0_2 = arith.constant 0 : index
    %7 = vector.load %arg5[%c0_1, %c0_2] : memref<32x32xf32, #tpu.memory_space<vmem>>, vector<32x32xf32>
    %8 = tpu.transpose %7, [1, 0] : vector<32x32xf32> -> vector<32x32xf32>
    %9 = arith.select %5, %6, %8 : vector<32x32xi1>, vector<32x32xf32>
    %c0_3 = arith.constant 0 : index
    %c0_4 = arith.constant 0 : index
    %10 = vector.load %arg3[%c0_3, %c0_4] : memref<8x32xf32, #tpu.memory_space<vmem>>, vector<8x32xf32>
    %cst = arith.constant dense<0.000000e+00> : vector<8x32xf32>
    %11 = tpu.matmul %10, %9, %cst {dimension_numbers = #tpu.dot_dimension_numbers<[1], [0], [0], [1], [0, 0, 1, 1], [], []>} : vector<8x32xf32>, vector<32x32xf32>, vector<8x32xf32> -> vector<8x32xf32>
    %c0_5 = arith.constant 0 : index
    %c0_6 = arith.constant 0 : index
    %12 = vector.load %arg6[%c0_5, %c0_6] : memref<8x32xf32, #tpu.memory_space<vmem>>, vector<8x32xf32>
    tpu.vector_store %arg6[%c0_5, %c0_6], %11 {strides = array<i32>} : memref<8x32xf32, #tpu.memory_space<vmem>>, vector<8x32xf32>,
    return
  }
  func.func @transform_0(%arg0: i32, %arg1: i32, %arg2: i32) -> (i32, i32) {
    %c0_i32 = arith.constant 0 : i32
    return %arg0, %arg2 : i32, i32
  }
  func.func @transform_1(%arg0: i32, %arg1: i32, %arg2: i32) -> (i32, i32) {
    %c0_i32 = arith.constant 0 : i32
    return %arg2, %arg1 : i32, i32
  }
  func.func @transform_2(%arg0: i32, %arg1: i32, %arg2: i32) -> (i32, i32) {
    %c0_i32 = arith.constant 0 : i32
    return %arg1, %arg2 : i32, i32
  }
  func.func @transform_3(%arg0: i32, %arg1: i32, %arg2: i32) -> (i32, i32) {
    %c0_i32 = arith.constant 0 : i32
    return %arg0, %arg1 : i32, i32
  }
}

</mosaic_0001>

<llo_original>
// kernel: tpu_custom_call.1
$region0: #{tpu_custom_call.1}
  #allocation0 [shape = 'u32[]', space=smem, size = 0x4, offset = 0x4, fixed_abs, tag = 'smem constant byte address 0x4 - core index']
  #allocation1 [shape = 'u32[144,128]{1,0:T(1,128)}', space=vmem, size = 0x12000, scoped, tag = 'internal scratch']
  %s0 = inlined_call_operand.hbm [shape: f32[8,32], index: 0, kind: input, shape index: {}]
  %s1 = inlined_call_operand.hbm [shape: f32[32,32], index: 1, kind: input, shape index: {}]
  %s2 = inlined_call_operand.hbm [shape: f32[32,32], index: 2, kind: input, shape index: {}]
  %s3 = inlined_call_operand.hbm [shape: f32[8,32], index: 3, kind: output, shape index: {}]
  %s4 = sld [smem:[#allocation0]]
  $region34: #{tpu_custom_call.1} parent=0
    _
  %s6 = ssub.s32 1, %s4
  %s7 = scalar_select 0, %s6, %s4
  $region1: #{tpu_custom_call.1} parent=0
    #allocation2 [shape = 'u8[4096]{0}', space=vmem, size = 0x1000, scoped, tag = 'input window, operand 0, single buffered']
    #allocation3 [shape = 's32[1]{0}', space=sflag, size = 0x4, scoped, tag = 'scoped memory for tpu_custom_call.1']
    #allocation4 [shape = 's32[1]{0}', space=sflag, size = 0x4, scoped, tag = 'scoped memory for tpu_custom_call.1']
    #allocation5 [shape = 'u8[16384]{0}', space=vmem, size = 0x4000, scoped, tag = 'input window, operand 1, single buffered']
    #allocation6 [shape = 's32[1]{0}', space=sflag, size = 0x4, scoped, tag = 'scoped memory for tpu_custom_call.1']
    #allocation7 [shape = 'u8[16384]{0}', space=vmem, size = 0x4000, scoped, tag = 'input window, operand 2, single buffered']
    #allocation8 [shape = 'u8[4096]{0}', space=vmem, size = 0x1000, scoped, tag = 'output window, operand 0, single buffered']
    %8 = vsyncpa [#allocation3], 0
    %9 = vsyncpa [#allocation6], 0
    %10 = vsyncpa [#allocation4], 0
    // Predicated region
    $region2: #{tpu_custom_call.1} parent=1 // pred_check
      _
    $region3: #{tpu_custom_call.1} parent=1 // pred_check_branch
      %12 = sbr.rel (0) target = $region5
    $region4: #{tpu_custom_call.1} parent=1 // pred_region
      %s14 = ssub.s32 128, 128
      %15 = vsyncadd [#allocation3], %s14
      %s17 = sshll.u32 [#allocation2], 4
      %s18 = int_to_ptr.vmem [resolvable:$true] %s17
      %20 = dma.hbm_to_vmem [thread:$0]  %s0, 128, %s18, [#allocation3]
    $region5: #{tpu_custom_call.1} parent=1 // pred_fallthru
      _
    // Predicated region
    $region6: #{tpu_custom_call.1} parent=1 // pred_check
      _
    $region7: #{tpu_custom_call.1} parent=1 // pred_check_branch
      %22 = sbr.rel (0) target = $region9
    $region8: #{tpu_custom_call.1} parent=1 // pred_region
      %s24 = ssub.s32 512, 512
      %25 = vsyncadd [#allocation6], %s24
      %s26 = sshll.u32 [#allocation5], 4
      %s27 = int_to_ptr.vmem [resolvable:$true] %s26
      %32 = dma.hbm_to_vmem [thread:$0]  %s1, 512, %s27, [#allocation6], 128, 128, 8
    $region9: #{tpu_custom_call.1} parent=1 // pred_fallthru
      _
    // Predicated region
    $region10: #{tpu_custom_call.1} parent=1 // pred_check
      _
    $region11: #{tpu_custom_call.1} parent=1 // pred_check_branch
      %34 = sbr.rel (0) target = $region13
    $region12: #{tpu_custom_call.1} parent=1 // pred_region
      %s36 = ssub.s32 512, 512
      %37 = vsyncadd [#allocation6], %s36
      %s38 = sshll.u32 [#allocation7], 4
      %s39 = int_to_ptr.vmem [resolvable:$true] %s38
      %44 = dma.hbm_to_vmem [thread:$0]  %s2, 512, %s39, [#allocation6], 128, 128, 8
    $region13: #{tpu_custom_call.1} parent=1 // pred_fallthru
      _
    // Predicated region
    $region14: #{tpu_custom_call.1} parent=1 // pred_check
      _
    $region15: #{tpu_custom_call.1} parent=1 // pred_check_branch
      %46 = sbr.rel (0) target = $region17
    $region16: #{tpu_custom_call.1} parent=1 // pred_region
      %47 = dma.done [#allocation3], 128
    $region17: #{tpu_custom_call.1} parent=1 // pred_fallthru
      _
    // Predicated region
    $region18: #{tpu_custom_call.1} parent=1 // pred_check
      _
    $region19: #{tpu_custom_call.1} parent=1 // pred_check_branch
      %49 = sbr.rel (0) target = $region21
    $region20: #{tpu_custom_call.1} parent=1 // pred_region
      %50 = dma.done [#allocation6], 512
    $region21: #{tpu_custom_call.1} parent=1 // pred_fallthru
      _
    // Predicated region
    $region22: #{tpu_custom_call.1} parent=1 // pred_check
      _
    $region23: #{tpu_custom_call.1} parent=1 // pred_check_branch
      %52 = sbr.rel (0) target = $region25
    $region24: #{tpu_custom_call.1} parent=1 // pred_region
      %53 = dma.done [#allocation6], 512
    $region25: #{tpu_custom_call.1} parent=1 // pred_fallthru
      _
    %v54 = vlaneseq
    %v55 = vshrl.u32 %v54, 7
    %v56 = vadd.s32 %v55, 8
    %v57 = vadd.s32 %v55, 16
    %v58 = vadd.s32 %v55, 24
    %s59 = smul.u32 0, 32
    %v60 = vlaneseq
    %v61 = vand.u32 %v60, 127
    %v62 = vstv %s59
    %v63 = vadd.s32 %v62, %v61
    %vm64 = vcmp.ge.s32.totalorder %v63, %v55
    %vm65 = vcmp.ge.s32.totalorder %v63, %v56
    %vm66 = vcmp.ge.s32.totalorder %v63, %v57
    %vm67 = vcmp.ge.s32.totalorder %v63, %v58
    %v68 = vld [vmem:[#allocation5] sm:$0xff]
    %v69 = vld [vmem:[#allocation5 + $0x8] sm:$0xff]
    %v70 = vld [vmem:[#allocation5 + $0x10] sm:$0xff]
    %v71 = vld [vmem:[#allocation5 + $0x18] sm:$0xff]
    %v72 = vld [vmem:[#allocation7] sm:$0xff]
    %v73 = vld [vmem:[#allocation7 + $0x8] sm:$0xff]
    %v74 = vld [vmem:[#allocation7 + $0x10] sm:$0xff]
    %v75 = vld [vmem:[#allocation7 + $0x18] sm:$0xff]
    %76 = vxpose.xlu0.b32.start [1/16] %v72, 128
    %77 = vxpose.xlu0.b32.cont [2/16] %v73, 128
    %78 = vxpose.xlu0.b32.cont [3/16] %v74, 128
    %79 = vxpose.xlu0.b32.cont [4/16] %v75, 128
    %80 = vxpose.xlu0.b32.cont [5/16] 0.0, 128
    %81 = vxpose.xlu0.b32.cont [6/16] 0.0, 128
    %82 = vxpose.xlu0.b32.cont [7/16] 0.0, 128
    %83 = vxpose.xlu0.b32.cont [8/16] 0.0, 128
    %84 = vxpose.xlu0.b32.cont [9/16] 0.0, 128
    %85 = vxpose.xlu0.b32.cont [10/16] 0.0, 128
    %86 = vxpose.xlu0.b32.cont [11/16] 0.0, 128
    %87 = vxpose.xlu0.b32.cont [12/16] 0.0, 128
    %88 = vxpose.xlu0.b32.cont [13/16] 0.0, 128
    %89 = vxpose.xlu0.b32.cont [14/16] 0.0, 128
    %90 = vxpose.xlu0.b32.cont [15/16] 0.0, 128
    %91 = vxpose.xlu0.b32.end [16/16] 0.0, 128
    %v92 = vpop.trf.xlu0
    %v93 = vpop.trf.xlu0
    %v94 = vpop.trf.xlu0
    %v95 = vpop.trf.xlu0
    %v96 = vpop.trf.xlu0
    %v97 = vpop.trf.xlu0
    %v98 = vpop.trf.xlu0
    %v99 = vpop.trf.xlu0
    %v100 = vpop.trf.xlu0
    %v101 = vpop.trf.xlu0
    %v102 = vpop.trf.xlu0
    %v103 = vpop.trf.xlu0
    %v104 = vpop.trf.xlu0
    %v105 = vpop.trf.xlu0
    %v106 = vpop.trf.xlu0
    %v107 = vpop.trf.xlu0
    %v108 = vsel %vm64, %v68, %v92
    %v109 = vsel %vm65, %v69, %v93
    %v110 = vsel %vm66, %v70, %v94
    %v111 = vsel %vm67, %v71, %v95
    %v112 = vld [vmem:[#allocation2] sm:$0xff]
    %vm113 = vcmask 261120
    %v115 = vsel %vm113, %v112, 0
    %117 = vmatprep.subr.mxu0 0.0
    %118 = vmatpush1.msra.mxu0 %v108
    %119 = vmatprep.subr.mxu0 0.0
    %120 = vmatpush1.msra.mxu0 %v109
    %121 = vmatprep.subr.mxu0 0.0
    %122 = vmatpush1.msra.mxu0 %v110
    %123 = vmatprep.subr.mxu0 0.0
    %124 = vmatpush1.msra.mxu0 %v111
    %125 = vmatprep.subr.mxu0 0.0
    %126 = vmatpush1.msra.mxu0 0.0
    %127 = vmatprep.subr.mxu0 0.0
    %128 = vmatpush1.msra.mxu0 0.0
    %129 = vmatprep.subr.mxu0 0.0
    %130 = vmatpush1.msra.mxu0 0.0
    %131 = vmatprep.subr.mxu0 0.0
    %132 = vmatpush1.msra.mxu0 0.0
    %133 = vmatprep.subr.mxu0 0.0
    %134 = vmatpush1.msra.mxu0 0.0
    %135 = vmatprep.subr.mxu0 0.0
    %136 = vmatpush1.msra.mxu0 0.0
    %137 = vmatprep.subr.mxu0 0.0
    %138 = vmatpush1.msra.mxu0 0.0
    %139 = vmatprep.subr.mxu0 0.0
    %140 = vmatpush1.msra.mxu0 0.0
    %141 = vmatprep.subr.mxu0 0.0
    %142 = vmatpush1.msra.mxu0 0.0
    %143 = vmatprep.subr.mxu0 0.0
    %144 = vmatpush1.msra.mxu0 0.0
    %145 = vmatprep.subr.mxu0 0.0
    %146 = vmatpush1.msra.mxu0 0.0
    %147 = vmatprep.subr.mxu0 0.0
    %148 = vmatpush1.msra.mxu0 0.0
    %149 = vmatprep.subr.mxu0 0.0
    %150 = vmatpush1.msra.mxu0 0.0
    %151 = vmatprep.subr.mxu0 0.0
    %152 = vmatpush1.msra.mxu0 0.0
    %153 = vmatprep.subr.mxu0 0.0
    %154 = vmatpush1.msra.mxu0 0.0
    %155 = vmatprep.subr.mxu0 0.0
    %156 = vmatpush1.msra.mxu0 0.0
    %157 = vmatprep.subr.mxu0 0.0
    %158 = vmatpush1.msra.mxu0 0.0
    %159 = vmatprep.subr.mxu0 0.0
    %160 = vmatpush1.msra.mxu0 0.0
    %161 = vmatprep.subr.mxu0 0.0
    %162 = vmatpush1.msra.mxu0 0.0
    %163 = vmatprep.subr.mxu0 0.0
    %164 = vmatpush1.msra.mxu0 0.0
    %165 = vmatprep.subr.mxu0 0.0
    %166 = vmatpush1.msra.mxu0 0.0
    %167 = vmatprep.subr.mxu0 0.0
    %168 = vmatpush1.msra.mxu0 0.0
    %169 = vmatprep.subr.mxu0 0.0
    %170 = vmatpush1.msra.mxu0 0.0
    %171 = vmatprep.subr.mxu0 0.0
    %172 = vmatpush1.msra.mxu0 0.0
    %173 = vmatprep.subr.mxu0 0.0
    %174 = vmatpush1.msra.mxu0 0.0
    %175 = vmatprep.subr.mxu0 0.0
    %176 = vmatpush1.msra.mxu0 0.0
    %177 = vmatprep.subr.mxu0 0.0
    %178 = vmatpush1.msra.mxu0 0.0
    %179 = vmatprep.subr.mxu0 0.0
    %180 = vmatpush1.msra.mxu0 0.0
    %181 = vmatprep.mubr.f32.mxu0 0.0
    %182 = vmatmul.mubr.f32.gmra.mrb[0].mxu0 %v115
    %v183 = vpop.f32.mrb[0].mxu0
    %v184 = vadd.f32 0.0, %v183
    %v185 = vpop.f32.mrb[0].mxu0
    %186 = vdwg.mxu0
    %187 = vst.msk [vmem:[#allocation8] sm:$0xff] %vm113, %v184
    // Predicated region
    $region26: #{tpu_custom_call.1} parent=1 // pred_check
      _
    $region27: #{tpu_custom_call.1} parent=1 // pred_check_branch
      %189 = sbr.rel (0) target = $region29
    $region28: #{tpu_custom_call.1} parent=1 // pred_region
      %s191 = ssub.s32 128, 128
      %192 = vsyncadd [#allocation4], %s191
      %s194 = sshll.u32 [#allocation8], 4
      %s195 = int_to_ptr.vmem [resolvable:$true] %s194
      %197 = dma.vmem_to_hbm [thread:$0]  %s195, 128, %s3, [#allocation4]
    $region29: #{tpu_custom_call.1} parent=1 // pred_fallthru
      _
    // Predicated region
    $region30: #{tpu_custom_call.1} parent=1 // pred_check
      _
    $region31: #{tpu_custom_call.1} parent=1 // pred_check_branch
      %199 = sbr.rel (0) target = $region33
    $region32: #{tpu_custom_call.1} parent=1 // pred_region
      %200 = dma.done [#allocation4], 128
    $region33: #{tpu_custom_call.1} parent=1 // pred_fallthru
      _
    %201 = vsyncpa [#allocation3], 1
    %202 = vsyncpa [#allocation6], 1
    %203 = vsyncpa [#allocation4], 1

</llo_original>
